<compile_context>
chip_gen: v7x
topology: tpu7x:2x2x1
jax: 0.10.0
libtpu: 0.0.40
codegen_flags: <defaults>
</compile_context>

<pallas_src>
import functools

import jax
import jax.numpy as jnp
from jax.experimental import pallas as pl
from jax.experimental.pallas import tpu as pltpu

_LANE = 128


def _round_up(v, m):
    return ((v + m - 1) // m) * m


# ---------------------------------------------------------------------------
# Per-generation VMEM sizing (queried once; conservative v7x-sized fallback).
#   v7x     : 64 MiB physical  -> 32 MiB scoped limit, 24 MiB pipelined budget
#   v5e/v6e : 128 MiB physical -> 64 MiB scoped limit, 48 MiB pipelined budget
# ---------------------------------------------------------------------------
def _vmem_settings():
    cap = None
    try:
        info = pltpu.get_tpu_info()
        cap = getattr(info, "vmem_capacity_bytes", None)
    except Exception:
        cap = None
    if not cap:
        cap = 64 * 1024 * 1024  # assume the smallest (v7x) part
    limit = max(32 * 1024 * 1024, min(cap // 2, 64 * 1024 * 1024))
    budget = (limit * 3) // 4   # headroom for Mosaic internal scratch / bias pad
    return budget, limit


_VMEM_BUDGET, _VMEM_LIMIT = _vmem_settings()


# ---------------------------------------------------------------------------
# Kernels
# ---------------------------------------------------------------------------
def _fc_single_block_kernel(x_ref, w_ref, b_ref, o_ref):
    """Whole problem resident in VMEM: one MXU pass + bias add."""
    o_ref[...] = (
        jnp.dot(x_ref[...], w_ref[...], preferred_element_type=jnp.float32)
        + b_ref[...].astype(jnp.float32)
    ).astype(o_ref.dtype)


def _fc_tiled_kernel_f32out(x_ref, w_ref, b_ref, o_ref):
    """Output-stationary (tm, tn) tile, f32 output: accumulate directly into
    o_ref (no scratch). Bias seeds the accumulator at k == 0, so there is no
    epilogue broadcast/add."""
    @pl.when(pl.program_id(2) == 0)
    def _():
        o_ref[...] = jnp.broadcast_to(
            b_ref[...].astype(o_ref.dtype), o_ref.shape
        )

    o_ref[...] += jnp.dot(
        x_ref[...], w_ref[...], preferred_element_type=jnp.float32
    )


def _fc_tiled_kernel_scratch(x_ref, w_ref, b_ref, o_ref, acc_ref):
    """Non-f32 outputs: f32 accumulator scratch (bias-seeded) + cast epilogue."""
    k = pl.program_id(2)

    @pl.when(k == 0)
    def _():
        acc_ref[...] = jnp.broadcast_to(
            b_ref[...].astype(jnp.float32), acc_ref.shape
        )

    acc_ref[...] += jnp.dot(
        x_ref[...], w_ref[...], preferred_element_type=jnp.float32
    )

    @pl.when(k == pl.num_programs(2) - 1)
    def _():
        o_ref[...] = acc_ref[...].astype(o_ref.dtype)


# ---------------------------------------------------------------------------
# Tile selection
# ---------------------------------------------------------------------------
def _choose_tiles(M, K, N, itemsize, budget):
    """Pick (tm, tn, tk, buffered_w).

    A tile dim is either the full array dim (always legal) or a
    lane/sublane-aligned tile strictly smaller than the dim.
    """
    sub = 8 if itemsize >= 4 else 16
    gemv = M <= 64

    if gemv:
        # HBM-bound on streaming W: wide N, deep K tiles.
        tm_cap, tn_cap, tk_cap = 256, 2048, 2048
    else:
        # MXU regime: large output tiles to raise arithmetic intensity.
        tm_cap = 512 if M >= 512 else 256
        tn_cap = 1024
        tk_cap = 2048 if budget >= (40 << 20) else 1024  # tk=1024 on v7x

    tm = M if M <= tm_cap else tm_cap
    tn = N if N <= tn_cap else tn_cap
    tk = K if K <= tk_cap else tk_cap

    # v7x has 2 TensorCores sharded over the 'parallel' grid axes: in the GEMV
    # regime make sure N has >= 2 blocks so both cores stream disjoint W halves.
    if gemv and N <= tn and N >= 2 * _LANE:
        tn = _round_up(pl.cdiv(N, 2), _LANE)

    def ws(tm_, tn_, tk_, w_bufs):
        return (
            2 * tm_ * tk_ * itemsize        # double-buffered x tiles
            + w_bufs * tk_ * tn_ * itemsize  # buffered w tiles
            + 3 * tm_ * tn_ * 4              # out tile (dbl-buf) + acc, f32 worst case
            + 2 * 8 * tn_ * 4                # bias tile (sublane-padded)
        )

    # Shrink tk, then tn, then tm until the pipelined working set fits.
    while ws(tm, tn, tk, 2) > budget:
        new = max(_LANE, ((tk // 2) // _LANE) * _LANE)
        if new >= tk:
            break
        tk = new
    while ws(tm, tn, tk, 2) > budget:
        new = max(_LANE, ((tn // 2) // _LANE) * _LANE)
        if new >= tn:
            break
        tn = new
    while ws(tm, tn, tk, 2) > budget:
        new = max(sub, ((tm // 2) // sub) * sub)
        if new >= tm:
            break
        tm = new

    buffered = gemv and ws(tm, tn, tk, 3) <= budget
    return tm, tn, tk, buffered


def _weight_spec(tk, tn, buffered):
    index_map = lambda i, j, k: (k, j)
    if buffered and hasattr(pl, "Buffered"):
        try:
            # Deeper prefetch of the DMA-dominant operand in the HBM-bound regime.
            return pl.BlockSpec((tk, tn), index_map, pipeline_mode=pl.Buffered(3))
        except TypeError:
            pass
    return pl.BlockSpec((tk, tn), index_map)


# ---------------------------------------------------------------------------
# Wrapper
# ---------------------------------------------------------------------------
@functools.partial(jax.jit, static_argnames=("cast_to_bf16", "force_tiled"))
def fc_forward(x, weights, bias, *, cast_to_bf16=False, force_tiled=False):
    """Pallas TPU forward for FCLayer: out = x @ weights + bias."""
    M, K = x.shape
    Kw, N = weights.shape
    assert K == Kw and bias.shape == (N,)
    out_dtype = x.dtype

    if cast_to_bf16:
        # Optional: bf16 streamed operands + f32 accumulation (halves HBM
        # traffic, ~2x MXU throughput). Off by default to keep f32 output.
        x = x.astype(jnp.bfloat16)
        weights = weights.astype(jnp.bfloat16)

    itemsize = x.dtype.itemsize
    out_itemsize = jnp.dtype(out_dtype).itemsize
    flops = 2 * M * N * K
    bytes_accessed = (
        (M * K + K * N) * itemsize + M * N * out_itemsize + N * bias.dtype.itemsize
    )
    cost = pl.CostEstimate(
        flops=flops, bytes_accessed=bytes_accessed, transcendentals=0
    )

    bias2d = bias.reshape(1, N)

    # ---- Fast path: whole problem resident in VMEM as a single block. ----
    sub = 8 if itemsize >= 4 else 16
    resident = (
        (_round_up(M, sub) * _round_up(K, _LANE)
         + _round_up(K, sub) * _round_up(N, _LANE)) * itemsize
        + _round_up(M, sub) * _round_up(N, _LANE) * out_itemsize
        + 8 * _round_up(N, _LANE) * bias.dtype.itemsize
    )
    if not force_tiled and resident <= _VMEM_BUDGET:
        return pl.pallas_call(
            _fc_single_block_kernel,
            out_shape=jax.ShapeDtypeStruct((M, N), out_dtype),
            cost_estimate=cost,
            compiler_params=pltpu.CompilerParams(vmem_limit_bytes=_VMEM_LIMIT),
        )(x, weights, bias2d)

    # ---- Tiled path: output-stationary (tm, tn) tiles, K innermost.      ----
    # No M/N padding: Pallas masks partial boundary blocks (garbage rows of x
    # / cols of W only affect out-of-bounds output elements that are never
    # written back). The K (contraction) tail MUST be exact, so pad K only.
    tm, tn, tk, buffered = _choose_tiles(M, K, N, itemsize, _VMEM_BUDGET)

    if tk >= K:
        tk, Kp = K, K
    else:
        nk = pl.cdiv(K, tk)  # balance K steps to minimize padding
        tk = min(tk, _round_up(pl.cdiv(_round_up(K, _LANE), nk), _LANE))
        Kp = nk * tk
        if Kp != K:
            x = jnp.pad(x, ((0, 0), (0, Kp - K)))
            weights = jnp.pad(weights, ((0, Kp - K), (0, 0)))

    grid = (pl.cdiv(M, tm), pl.cdiv(N, tn), Kp // tk)

    if jnp.dtype(out_dtype) == jnp.dtype(jnp.float32):
        kernel = _fc_tiled_kernel_f32out   # accumulate straight into o_ref
        scratch = []
    else:
        kernel = _fc_tiled_kernel_scratch
        scratch = [pltpu.VMEM((tm, tn), jnp.float32)]

    return pl.pallas_call(
        kernel,
        out_shape=jax.ShapeDtypeStruct((M, N), out_dtype),
        grid_spec=pltpu.PrefetchScalarGridSpec(
            num_scalar_prefetch=0,
            grid=grid,
            in_specs=[
                pl.BlockSpec((tm, tk), lambda i, j, k: (i, k)),   # x tile
                _weight_spec(tk, tn, buffered),                   # w tile
                pl.BlockSpec((1, tn), lambda i, j, k: (0, j)),    # bias tile
            ],
            out_specs=pl.BlockSpec((tm, tn), lambda i, j, k: (i, j)),
            scratch_shapes=scratch,
        ),
        compiler_params=pltpu.CompilerParams(
            dimension_semantics=("parallel", "parallel", "arbitrary"),
            vmem_limit_bytes=_VMEM_LIMIT,
        ),
        cost_estimate=cost,
    )(x, weights, bias2d)


if __name__ == "__main__":
    key = jax.random.PRNGKey(0)
    kx, kw, kx2, kw2 = jax.random.split(key, 4)
    kx3, kw3 = jax.random.split(jax.random.PRNGKey(1), 2)

    # --- (a) FCLayer(input_dim=256, output_dim=128), batch of 8 rows:
    #         whole problem runs as a single VMEM block (fast path).
    M, K, N = 8, 256, 128
    x = jax.random.normal(kx, (M, K), dtype=jnp.float32)
    # Parameter init matching torch: randn(in, out) * 0.01, zeros(out).
    weights = jax.random.normal(kw, (K, N), dtype=jnp.float32) * 0.01
    bias = jnp.zeros((N,), dtype=jnp.float32)
    out = fc_forward(x, weights, bias)
    jax.block_until_ready(out)
    ref = x @ weights + bias
    assert out.shape == (M, N)
    assert jnp.allclose(out, ref, atol=1e-5, rtol=1e-5)

    # --- (b) unaligned MXU-regime shape, forced onto the tiled path:
    #         partial M boundary block, multi-step K reduction, K padding.
    M2, K2, N2 = 300, 2500, 900
    x2 = jax.random.normal(kx2, (M2, K2), dtype=jnp.float32)
    w2 = jax.random.normal(kw2, (K2, N2), dtype=jnp.float32) * 0.01
    b2 = jnp.full((N2,), 0.5, dtype=jnp.float32)
    out2 = fc_forward(x2, w2, b2, force_tiled=True)
    jax.block_until_ready(out2)
    ref2 = jnp.dot(x2, w2, precision=jax.lax.Precision.HIGHEST) + b2
    assert out2.shape == (M2, N2)
    rel2 = jnp.max(jnp.abs(out2 - ref2)) / (jnp.max(jnp.abs(ref2)) + 1e-30)
    assert rel2 < 1e-2, f"tiled MXU path mismatch: rel_err={rel2}"

    # --- (c) small-batch GEMV regime, forced onto the tiled path:
    #         dual-TC N split, Buffered(3) W prefetch, partial N block.
    M3, K3, N3 = 8, 512, 1100
    x3 = jax.random.normal(kx3, (M3, K3), dtype=jnp.float32)
    w3 = jax.random.normal(kw3, (K3, N3), dtype=jnp.float32) * 0.01
    b3 = jnp.full((N3,), 0.25, dtype=jnp.float32)
    out3 = fc_forward(x3, w3, b3, force_tiled=True)
    jax.block_until_ready(out3)
    ref3 = jnp.dot(x3, w3, precision=jax.lax.Precision.HIGHEST) + b3
    assert out3.shape == (M3, N3)
    rel3 = jnp.max(jnp.abs(out3 - ref3)) / (jnp.max(jnp.abs(ref3)) + 1e-30)
    assert rel3 < 1e-2, f"tiled GEMV path mismatch: rel_err={rel3}"

    print("KERNEL_OK")
</pallas_src>

<mosaic_0001>
module attributes {stable_mosaic.version = 11 : i64} {
  func.func @_fc_single_block_kernel(%arg0: memref<8x256xf32, #tpu.memory_space<vmem>>, %arg1: memref<256x128xf32, #tpu.memory_space<vmem>>, %arg2: memref<1x128xf32, #tpu.memory_space<vmem>>, %arg3: memref<8x128xf32, #tpu.memory_space<vmem>>) attributes {dimension_semantics = [], scalar_prefetch = 0 : i64, scratch_operands = 0 : i64, tpu.core_type = #tpu.core_type<tc>} {
    %c0 = arith.constant 0 : index
    %c0_0 = arith.constant 0 : index
    %0 = vector.load %arg0[%c0, %c0_0] : memref<8x256xf32, #tpu.memory_space<vmem>>, vector<8x256xf32>
    %c0_1 = arith.constant 0 : index
    %c0_2 = arith.constant 0 : index
    %1 = vector.load %arg1[%c0_1, %c0_2] : memref<256x128xf32, #tpu.memory_space<vmem>>, vector<256x128xf32>
    %cst = arith.constant dense<0.000000e+00> : vector<8x128xf32>
    %2 = tpu.matmul %0, %1, %cst {dimension_numbers = #tpu.dot_dimension_numbers<[1], [0], [0], [1], [0, 0, 1, 1], [], []>} : vector<8x256xf32>, vector<256x128xf32>, vector<8x128xf32> -> vector<8x128xf32>
    %c0_3 = arith.constant 0 : index
    %c0_4 = arith.constant 0 : index
    %3 = vector.load %arg2[%c0_3, %c0_4] : memref<1x128xf32, #tpu.memory_space<vmem>>, vector<1x128xf32>
    %4 = vector.broadcast %3 : vector<1x128xf32> to vector<8x128xf32>
    %5 = arith.addf %2, %4 : vector<8x128xf32>
    %c0_5 = arith.constant 0 : index
    %c0_6 = arith.constant 0 : index
    %6 = vector.load %arg3[%c0_5, %c0_6] : memref<8x128xf32, #tpu.memory_space<vmem>>, vector<8x128xf32>
    tpu.vector_store %arg3[%c0_5, %c0_6], %5 {strides = array<i32>} : memref<8x128xf32, #tpu.memory_space<vmem>>, vector<8x128xf32>,
    return
  }
}

</mosaic_0001>

<llo_original>
// kernel: fc_forward.1
$region0: #{fc_forward.1}
  #allocation0 [shape = 'u32[]', space=smem, size = 0x4, offset = 0x4, fixed_abs, tag = 'smem constant byte address 0x4 - core index']
  #allocation1 [shape = 'u32[144,128]{1,0:T(1,128)}', space=vmem, size = 0x12000, scoped, tag = 'internal scratch']
  %s0 = inlined_call_operand.hbm [shape: f32[8,256], index: 0, kind: input, shape index: {}]
  %s1 = inlined_call_operand.hbm [shape: f32[256,128], index: 1, kind: input, shape index: {}]
  %s2 = inlined_call_operand.vmem [shape: f32[1,128], index: 2, kind: input, shape index: {}]
  %s3 = inlined_call_operand.hbm [shape: f32[8,128], index: 3, kind: output, shape index: {}]
  %s4 = sld [smem:[#allocation0]]
  $region30: #{fc_forward.1} parent=0
    _
  %s6 = ssub.s32 1, %s4
  %s7 = scalar_select 0, %s6, %s4
  $region1: #{fc_forward.1} parent=0
    #allocation2 [shape = 'u8[8192]{0}', space=vmem, size = 0x2000, scoped, tag = 'input window, operand 0, single buffered']
    #allocation3 [shape = 's32[1]{0}', space=sflag, size = 0x4, scoped, tag = 'scoped memory for fc_forward.1']
    #allocation4 [shape = 's32[1]{0}', space=sflag, size = 0x4, scoped, tag = 'scoped memory for fc_forward.1']
    #allocation5 [shape = 'u8[131072]{0}', space=vmem, size = 0x20000, scoped, tag = 'input window, operand 1, single buffered']
    #allocation6 [shape = 's32[1]{0}', space=sflag, size = 0x4, scoped, tag = 'scoped memory for fc_forward.1']
    #allocation7 [shape = 'u8[4096]{0}', space=vmem, size = 0x1000, scoped, tag = 'output window, operand 0, single buffered']
    %8 = vsyncpa [#allocation3], 0
    %9 = vsyncpa [#allocation6], 0
    %10 = vsyncpa [#allocation4], 0
    // Predicated region
    $region2: #{fc_forward.1} parent=1 // pred_check
      _
    $region3: #{fc_forward.1} parent=1 // pred_check_branch
      %12 = sbr.rel (0) target = $region5
    $region4: #{fc_forward.1} parent=1 // pred_region
      %s14 = ssub.s32 256, 256
      %15 = vsyncadd [#allocation3], %s14
      %s17 = sshll.u32 [#allocation2], 4
      %s18 = int_to_ptr.vmem [resolvable:$true] %s17
      %20 = dma.hbm_to_vmem [thread:$0]  %s0, 256, %s18, [#allocation3]
    $region5: #{fc_forward.1} parent=1 // pred_fallthru
      _
    // Predicated region
    $region6: #{fc_forward.1} parent=1 // pred_check
      _
    $region7: #{fc_forward.1} parent=1 // pred_check_branch
      %22 = sbr.rel (0) target = $region9
    $region8: #{fc_forward.1} parent=1 // pred_region
      %s24 = ssub.s32 4096, 4096
      %25 = vsyncadd [#allocation6], %s24
      %s26 = sshll.u32 [#allocation5], 4
      %s27 = int_to_ptr.vmem [resolvable:$true] %s26
      %32 = dma.hbm_to_vmem [thread:$0]  %s1, 4096, %s27, [#allocation6], 128, 128, 8
    $region9: #{fc_forward.1} parent=1 // pred_fallthru
      _
    // Predicated region
    $region10: #{fc_forward.1} parent=1 // pred_check
      _
    $region11: #{fc_forward.1} parent=1 // pred_check_branch
      %34 = sbr.rel (0) target = $region13
    $region12: #{fc_forward.1} parent=1 // pred_region
      _
    $region13: #{fc_forward.1} parent=1 // pred_fallthru
      _
    // Predicated region
    $region14: #{fc_forward.1} parent=1 // pred_check
      _
    $region15: #{fc_forward.1} parent=1 // pred_check_branch
      %36 = sbr.rel (0) target = $region17
    $region16: #{fc_forward.1} parent=1 // pred_region
      %37 = dma.done [#allocation3], 256
    $region17: #{fc_forward.1} parent=1 // pred_fallthru
      _
    // Predicated region
    $region18: #{fc_forward.1} parent=1 // pred_check
      _
    $region19: #{fc_forward.1} parent=1 // pred_check_branch
      %39 = sbr.rel (0) target = $region21
    $region20: #{fc_forward.1} parent=1 // pred_region
      %40 = dma.done [#allocation6], 4096
    $region21: #{fc_forward.1} parent=1 // pred_fallthru
      _
    %v41 = vld [vmem:[#allocation2] sm:$0xff]
    %v42 = vld [vmem:[#allocation2 + $0x8] sm:$0xff]
    %v43 = vld [vmem:[#allocation5] sm:$0xff]
    %v44 = vld [vmem:[#allocation5 + $0x8] sm:$0xff]
    %v45 = vld [vmem:[#allocation5 + $0x10] sm:$0xff]
    %v46 = vld [vmem:[#allocation5 + $0x18] sm:$0xff]
    %v47 = vld [vmem:[#allocation5 + $0x20] sm:$0xff]
    %v48 = vld [vmem:[#allocation5 + $0x28] sm:$0xff]
    %v49 = vld [vmem:[#allocation5 + $0x30] sm:$0xff]
    %v50 = vld [vmem:[#allocation5 + $0x38] sm:$0xff]
    %v51 = vld [vmem:[#allocation5 + $0x40] sm:$0xff]
    %v52 = vld [vmem:[#allocation5 + $0x48] sm:$0xff]
    %v53 = vld [vmem:[#allocation5 + $0x50] sm:$0xff]
    %v54 = vld [vmem:[#allocation5 + $0x58] sm:$0xff]
    %v55 = vld [vmem:[#allocation5 + $0x60] sm:$0xff]
    %v56 = vld [vmem:[#allocation5 + $0x68] sm:$0xff]
    %v57 = vld [vmem:[#allocation5 + $0x70] sm:$0xff]
    %v58 = vld [vmem:[#allocation5 + $0x78] sm:$0xff]
    %v59 = vld [vmem:[#allocation5 + $0x80] sm:$0xff]
    %v60 = vld [vmem:[#allocation5 + $0x88] sm:$0xff]
    %v61 = vld [vmem:[#allocation5 + $0x90] sm:$0xff]
    %v62 = vld [vmem:[#allocation5 + $0x98] sm:$0xff]
    %v63 = vld [vmem:[#allocation5 + $0xa0] sm:$0xff]
    %v64 = vld [vmem:[#allocation5 + $0xa8] sm:$0xff]
    %v65 = vld [vmem:[#allocation5 + $0xb0] sm:$0xff]
    %v66 = vld [vmem:[#allocation5 + $0xb8] sm:$0xff]
    %v67 = vld [vmem:[#allocation5 + $0xc0] sm:$0xff]
    %v68 = vld [vmem:[#allocation5 + $0xc8] sm:$0xff]
    %v69 = vld [vmem:[#allocation5 + $0xd0] sm:$0xff]
    %v70 = vld [vmem:[#allocation5 + $0xd8] sm:$0xff]
    %v71 = vld [vmem:[#allocation5 + $0xe0] sm:$0xff]
    %v72 = vld [vmem:[#allocation5 + $0xe8] sm:$0xff]
    %v73 = vld [vmem:[#allocation5 + $0xf0] sm:$0xff]
    %v74 = vld [vmem:[#allocation5 + $0xf8] sm:$0xff]
    %v75 = vld [vmem:[%s2] sm:$0x1]
    %v77 = vlaneseq
    %v78 = vshrl.u32 %v77, 7
    %v79 = vsub.s32 0, %v78
    %v80 = vrot.slane %v75, %v79
    %82 = vmatprep.subr.mxu0 0.0
    %83 = vmatpush1.msra.mxu0 %v43
    %84 = vmatprep.subr.mxu0 0.0
    %85 = vmatpush1.msra.mxu0 %v44
    %86 = vmatprep.subr.mxu0 0.0
    %87 = vmatpush1.msra.mxu0 %v45
    %88 = vmatprep.subr.mxu0 0.0
    %89 = vmatpush1.msra.mxu0 %v46
    %90 = vmatprep.subr.mxu0 0.0
    %91 = vmatpush1.msra.mxu0 %v47
    %92 = vmatprep.subr.mxu0 0.0
    %93 = vmatpush1.msra.mxu0 %v48
    %94 = vmatprep.subr.mxu0 0.0
    %95 = vmatpush1.msra.mxu0 %v49
    %96 = vmatprep.subr.mxu0 0.0
    %97 = vmatpush1.msra.mxu0 %v50
    %98 = vmatprep.subr.mxu0 0.0
    %99 = vmatpush1.msra.mxu0 %v51
    %100 = vmatprep.subr.mxu0 0.0
    %101 = vmatpush1.msra.mxu0 %v52
    %102 = vmatprep.subr.mxu0 0.0
    %103 = vmatpush1.msra.mxu0 %v53
    %104 = vmatprep.subr.mxu0 0.0
    %105 = vmatpush1.msra.mxu0 %v54
    %106 = vmatprep.subr.mxu0 0.0
    %107 = vmatpush1.msra.mxu0 %v55
    %108 = vmatprep.subr.mxu0 0.0
    %109 = vmatpush1.msra.mxu0 %v56
    %110 = vmatprep.subr.mxu0 0.0
    %111 = vmatpush1.msra.mxu0 %v57
    %112 = vmatprep.subr.mxu0 0.0
    %113 = vmatpush1.msra.mxu0 %v58
    %114 = vmatprep.subr.mxu0 0.0
    %115 = vmatpush1.msra.mxu0 %v59
    %116 = vmatprep.subr.mxu0 0.0
    %117 = vmatpush1.msra.mxu0 %v60
    %118 = vmatprep.subr.mxu0 0.0
    %119 = vmatpush1.msra.mxu0 %v61
    %120 = vmatprep.subr.mxu0 0.0
    %121 = vmatpush1.msra.mxu0 %v62
    %122 = vmatprep.subr.mxu0 0.0
    %123 = vmatpush1.msra.mxu0 %v63
    %124 = vmatprep.subr.mxu0 0.0
    %125 = vmatpush1.msra.mxu0 %v64
    %126 = vmatprep.subr.mxu0 0.0
    %127 = vmatpush1.msra.mxu0 %v65
    %128 = vmatprep.subr.mxu0 0.0
    %129 = vmatpush1.msra.mxu0 %v66
    %130 = vmatprep.subr.mxu0 0.0
    %131 = vmatpush1.msra.mxu0 %v67
    %132 = vmatprep.subr.mxu0 0.0
    %133 = vmatpush1.msra.mxu0 %v68
    %134 = vmatprep.subr.mxu0 0.0
    %135 = vmatpush1.msra.mxu0 %v69
    %136 = vmatprep.subr.mxu0 0.0
    %137 = vmatpush1.msra.mxu0 %v70
    %138 = vmatprep.subr.mxu0 0.0
    %139 = vmatpush1.msra.mxu0 %v71
    %140 = vmatprep.subr.mxu0 0.0
    %141 = vmatpush1.msra.mxu0 %v72
    %142 = vmatprep.subr.mxu0 0.0
    %143 = vmatpush1.msra.mxu0 %v73
    %144 = vmatprep.subr.mxu0 0.0
    %145 = vmatpush1.msra.mxu0 %v74
    %146 = vmatprep.mubr.f32.mxu0 %v42
    %147 = vmatmul.mubr.f32.gmra.mrb[0].mxu0 %v41
    %v148 = vpop.f32.mrb[0].mxu0
    %v149 = vadd.f32 %v80, %v148
    %v150 = vpop.f32.mrb[0].mxu0
    %151 = vdwg.mxu0
    %152 = vst [vmem:[#allocation7] sm:$0xff] %v149
    // Predicated region
    $region22: #{fc_forward.1} parent=1 // pred_check
      _
    $region23: #{fc_forward.1} parent=1 // pred_check_branch
      %154 = sbr.rel (0) target = $region25
    $region24: #{fc_forward.1} parent=1 // pred_region
      %s156 = ssub.s32 128, 128
      %157 = vsyncadd [#allocation4], %s156
      %s159 = sshll.u32 [#allocation7], 4
      %s160 = int_to_ptr.vmem [resolvable:$true] %s159
      %162 = dma.vmem_to_hbm [thread:$0]  %s160, 128, %s3, [#allocation4]
    $region25: #{fc_forward.1} parent=1 // pred_fallthru
      _
    // Predicated region
    $region26: #{fc_forward.1} parent=1 // pred_check
      _
    $region27: #{fc_forward.1} parent=1 // pred_check_branch
      %164 = sbr.rel (0) target = $region29
    $region28: #{fc_forward.1} parent=1 // pred_region
      %165 = dma.done [#allocation4], 128
    $region29: #{fc_forward.1} parent=1 // pred_fallthru
      _
    %166 = vsyncpa [#allocation3], 1
    %167 = vsyncpa [#allocation6], 1
    %168 = vsyncpa [#allocation4], 1

</llo_original>
